<compile_context>
chip_gen: v7x
topology: tpu7x:2x2x1
jax: 0.10.0
libtpu: 0.0.40
codegen_flags: <defaults>
</compile_context>

<pallas_src>
import functools

import jax
import jax.numpy as jnp
from jax import lax
from jax.experimental import pallas as pl
from jax.experimental.pallas import tpu as pltpu


def _round_up(n, m):
    return ((n + m - 1) // m) * m


def _mlp_kernel(xT_ref, w1_ref, b1_ref, w2_ref, b2_ref, w3_ref, b3_ref, oT_ref,
                *, chunk, n_chunks):
    """Transposed layout: xT (2, TB), h1 (16, c), h2 (32, c), out (2, TB)."""
    w1 = w1_ref[...]          # (16, 2)   PyTorch (out, in) layout
    b1 = b1_ref[...]          # (16, 1)
    w2 = w2_ref[...]          # (32, 16)
    b2 = b2_ref[...]          # (32, 1)
    w3 = w3_ref[...]          # (2, 32)
    b3 = b3_ref[...]          # (2, 1)

    def compute_chunk(start, carry):
        x = xT_ref[:, pl.ds(start, chunk)]                          # (2, chunk)
        # Layer 1: Linear(2 -> 16) on the MXU (K=2), f32 accumulation.
        h1 = jnp.dot(w1, x, preferred_element_type=jnp.float32) + b1
        h1 = jnp.maximum(h1, 0.0)                                   # (16, chunk)
        # Layer 2: Linear(16 -> 32) on the MXU.
        h2 = jnp.dot(w2, h1, preferred_element_type=jnp.float32) + b2
        h2 = jnp.maximum(h2, 0.0)                                   # (32, chunk)
        # Layer 3: Linear(32 -> 2) on the MXU, one merged (2, chunk) store.
        y = jnp.dot(w3, h2, preferred_element_type=jnp.float32) + b3
        oT_ref[:, pl.ds(start, chunk)] = y.astype(oT_ref.dtype)
        return carry

    if n_chunks == 1:
        compute_chunk(0, None)
    else:
        def body(j, carry):
            return compute_chunk(pl.multiple_of(j * chunk, chunk), carry)
        lax.fori_loop(0, n_chunks, body, None,
                      unroll=True if n_chunks <= 8 else 2)


def generator_forward_transposed(xT, params, *, tb=8192):
    """Forward pass in the lane-dense transposed layout.

    xT: (2, B) float32 -> returns (2, B) float32.  Keeping activations in this
    layout in the surrounding program avoids the wrapper transpose/pad passes.
    """
    assert tb > 0 and tb % 128 == 0, "tb must be a positive multiple of 128"
    w1, b1 = params["w1"], params["b1"]
    w2, b2 = params["w2"], params["b2"]
    w3, b3 = params["w3"], params["b3"]
    assert xT.shape[0] == 2
    B = xT.shape[1]

    # Pad batch (lane axis) to a multiple of 128 and clamp the tile to it.
    padded_b = _round_up(max(B, 128), 128)
    tb_eff = min(tb, padded_b)
    # v7x has 2 TensorCores: keep >= 2 "parallel" grid steps when the batch is
    # big enough to split (harmless on single-TC v5e/v6e).
    if padded_b >= 256 and tb_eff >= padded_b:
        tb_eff = _round_up(padded_b // 2, 128)
    padded_b = _round_up(padded_b, tb_eff)
    if padded_b != B:
        xT = jnp.pad(xT, ((0, 0), (0, padded_b - B)))

    # Inner sub-chunk: keep h1/h2 in vregs instead of (feat, TB) VMEM slabs.
    chunk = next(c for c in (512, 256, 128) if tb_eff % c == 0)
    n_chunks = tb_eff // chunk

    grid = (padded_b // tb_eff,)
    kernel = functools.partial(_mlp_kernel, chunk=chunk, n_chunks=n_chunks)

    x_spec = pl.BlockSpec((2, tb_eff), lambda i: (0, i))
    out_spec = pl.BlockSpec((2, tb_eff), lambda i: (0, i))
    # Weights/biases (all 2-D): constant index_map -> fetched once, VMEM-resident.
    const = lambda a: pl.BlockSpec(a.shape, lambda i: (0, 0))

    outT = pl.pallas_call(
        kernel,
        out_shape=jax.ShapeDtypeStruct((2, padded_b), xT.dtype),
        grid=grid,
        in_specs=[x_spec, const(w1), const(b1), const(w2), const(b2),
                  const(w3), const(b3)],
        out_specs=out_spec,
        compiler_params=pltpu.CompilerParams(
            dimension_semantics=("parallel",),
            vmem_limit_bytes=48 * 1024 * 1024,   # stays under v7x's 64 MiB VMEM
        ),
    )(xT, w1, b1, w2, b2, w3, b3)

    return outT[:, :B] if padded_b != B else outT


def generator_forward(x, params, *, tb=8192):
    """PyTorch-interface forward: x (B, 2) float32 -> (B, 2) float32."""
    # TODO(synk): the x.T / .T passes here are extra XLA HBM traffic; callers
    # that can keep activations in the (2, B) layout should call
    # generator_forward_transposed directly.
    return generator_forward_transposed(x.T, params, tb=tb).T


def init_params(key):
    """PyTorch nn.Linear-style init U(-1/sqrt(fan_in), +1/sqrt(fan_in)).
    Weights kept in PyTorch (out, in) layout; biases stored as (out, 1)
    columns so they broadcast along the lane (batch) axis in the kernel."""
    def linear(key, fan_in, fan_out):
        kw, kb = jax.random.split(key)
        bound = 1.0 / jnp.sqrt(fan_in)
        w = jax.random.uniform(kw, (fan_out, fan_in), jnp.float32, -bound, bound)
        b = jax.random.uniform(kb, (fan_out, 1), jnp.float32, -bound, bound)
        return w, b

    k1, k2, k3 = jax.random.split(key, 3)
    w1, b1 = linear(k1, 2, 16)
    w2, b2 = linear(k2, 16, 32)
    w3, b3 = linear(k3, 32, 2)
    return {"w1": w1, "b1": b1, "w2": w2, "b2": b2, "w3": w3, "b3": b3}


def _reference_forward(x, params):
    h1 = jnp.maximum(x @ params["w1"].T + params["b1"].T, 0.0)
    h2 = jnp.maximum(h1 @ params["w2"].T + params["b2"].T, 0.0)
    return h2 @ params["w3"].T + params["b3"].T


if __name__ == "__main__":
    key = jax.random.PRNGKey(0)
    k_params, k_a, k_b, k_c = jax.random.split(key, 4)
    params = init_params(k_params)

    # f32 matmuls may take slightly different (near-f32) MXU precision paths in
    # the kernel vs the XLA reference; tolerance is loose enough for either
    # path but still catches layout / transpose / bias bugs (O(0.1-1) errors).
    tol = dict(atol=5e-3, rtol=5e-3)

    # Small batch consistent with the module (in_features = 2): single block.
    x = jax.random.normal(k_a, (8, 2), jnp.float32)
    out = jax.block_until_ready(generator_forward(x, params))
    assert out.shape == (8, 2)
    assert jnp.allclose(out, _reference_forward(x, params), **tol), "mismatch (B=8)"

    # Non-multiple-of-128 batch: exercises padding + the 2-step grid split.
    x2 = jax.random.normal(k_b, (300, 2), jnp.float32)
    out2 = jax.block_until_ready(generator_forward(x2, params))
    assert out2.shape == (300, 2)
    assert jnp.allclose(out2, _reference_forward(x2, params), **tol), "mismatch (B=300)"

    # Larger batch with a smaller tile: multi-step grid + multi-chunk inner loop.
    x3 = jax.random.normal(k_c, (2048, 2), jnp.float32)
    out3 = jax.block_until_ready(generator_forward(x3, params, tb=1024))
    assert out3.shape == (2048, 2)
    assert jnp.allclose(out3, _reference_forward(x3, params), **tol), "mismatch (B=2048)"

    print("KERNEL_OK")
</pallas_src>

<mosaic_0001>
module attributes {stable_mosaic.version = 11 : i64} {
  func.func @_mlp_kernel(%arg0: i32, %arg1: memref<2x128xf32, #tpu.memory_space<vmem>>, %arg2: memref<16x2xf32, #tpu.memory_space<vmem>>, %arg3: memref<16x1xf32, #tpu.memory_space<vmem>>, %arg4: memref<32x16xf32, #tpu.memory_space<vmem>>, %arg5: memref<32x1xf32, #tpu.memory_space<vmem>>, %arg6: memref<2x32xf32, #tpu.memory_space<vmem>>, %arg7: memref<2x1xf32, #tpu.memory_space<vmem>>, %arg8: memref<2x128xf32, #tpu.memory_space<vmem>>) attributes {dimension_semantics = [#tpu.dimension_semantics<parallel>], iteration_bounds = array<i64: 1>, scalar_prefetch = 0 : i64, scratch_operands = 0 : i64, tpu.core_type = #tpu.core_type<tc>, window_params = [{transform_indices = @transform_0, window_bounds = array<i64: 2, 128>}, {pipeline_mode = #tpu.pipeline_mode<synchronous>, transform_indices = @transform_1, window_bounds = array<i64: 16, 2>}, {pipeline_mode = #tpu.pipeline_mode<synchronous>, transform_indices = @transform_2, window_bounds = array<i64: 16, 1>}, {pipeline_mode = #tpu.pipeline_mode<synchronous>, transform_indices = @transform_3, window_bounds = array<i64: 32, 16>}, {pipeline_mode = #tpu.pipeline_mode<synchronous>, transform_indices = @transform_4, window_bounds = array<i64: 32, 1>}, {pipeline_mode = #tpu.pipeline_mode<synchronous>, transform_indices = @transform_5, window_bounds = array<i64: 2, 32>}, {pipeline_mode = #tpu.pipeline_mode<synchronous>, transform_indices = @transform_6, window_bounds = array<i64: 2, 1>}, {transform_indices = @transform_7, window_bounds = array<i64: 2, 128>}]} {
    %c0 = arith.constant 0 : index
    %c0_0 = arith.constant 0 : index
    %0 = vector.load %arg2[%c0, %c0_0] : memref<16x2xf32, #tpu.memory_space<vmem>>, vector<16x2xf32>
    %c0_1 = arith.constant 0 : index
    %c0_2 = arith.constant 0 : index
    %1 = vector.load %arg3[%c0_1, %c0_2] : memref<16x1xf32, #tpu.memory_space<vmem>>, vector<16x1xf32>
    %c0_3 = arith.constant 0 : index
    %c0_4 = arith.constant 0 : index
    %2 = vector.load %arg4[%c0_3, %c0_4] : memref<32x16xf32, #tpu.memory_space<vmem>>, vector<32x16xf32>
    %c0_5 = arith.constant 0 : index
    %c0_6 = arith.constant 0 : index
    %3 = vector.load %arg5[%c0_5, %c0_6] : memref<32x1xf32, #tpu.memory_space<vmem>>, vector<32x1xf32>
    %c0_7 = arith.constant 0 : index
    %c0_8 = arith.constant 0 : index
    %4 = vector.load %arg6[%c0_7, %c0_8] : memref<2x32xf32, #tpu.memory_space<vmem>>, vector<2x32xf32>
    %c0_9 = arith.constant 0 : index
    %c0_10 = arith.constant 0 : index
    %5 = vector.load %arg7[%c0_9, %c0_10] : memref<2x1xf32, #tpu.memory_space<vmem>>, vector<2x1xf32>
    %c0_11 = arith.constant 0 : index
    %c0_12 = arith.constant 0 : index
    %6 = vector.load %arg1[%c0_11, %c0_12] : memref<2x128xf32, #tpu.memory_space<vmem>>, vector<2x128xf32>
    %cst = arith.constant dense<0.000000e+00> : vector<16x128xf32>
    %7 = tpu.matmul %0, %6, %cst {dimension_numbers = #tpu.dot_dimension_numbers<[1], [0], [0], [1], [0, 0, 1, 1], [], []>} : vector<16x2xf32>, vector<2x128xf32>, vector<16x128xf32> -> vector<16x128xf32>
    %8 = vector.broadcast %1 : vector<16x1xf32> to vector<16x128xf32>
    %9 = arith.addf %7, %8 : vector<16x128xf32>
    %cst_13 = arith.constant 0.000000e+00 : f32
    %10 = vector.broadcast %cst_13 : f32 to vector<16x128xf32>
    %11 = arith.maximumf %9, %10 : vector<16x128xf32>
    %cst_14 = arith.constant dense<0.000000e+00> : vector<32x128xf32>
    %12 = tpu.matmul %2, %11, %cst_14 {dimension_numbers = #tpu.dot_dimension_numbers<[1], [0], [0], [1], [0, 0, 1, 1], [], []>} : vector<32x16xf32>, vector<16x128xf32>, vector<32x128xf32> -> vector<32x128xf32>
    %13 = vector.broadcast %3 : vector<32x1xf32> to vector<32x128xf32>
    %14 = arith.addf %12, %13 : vector<32x128xf32>
    %cst_15 = arith.constant 0.000000e+00 : f32
    %15 = vector.broadcast %cst_15 : f32 to vector<32x128xf32>
    %16 = arith.maximumf %14, %15 : vector<32x128xf32>
    %cst_16 = arith.constant dense<0.000000e+00> : vector<2x128xf32>
    %17 = tpu.matmul %4, %16, %cst_16 {dimension_numbers = #tpu.dot_dimension_numbers<[1], [0], [0], [1], [0, 0, 1, 1], [], []>} : vector<2x32xf32>, vector<32x128xf32>, vector<2x128xf32> -> vector<2x128xf32>
    %18 = vector.broadcast %5 : vector<2x1xf32> to vector<2x128xf32>
    %19 = arith.addf %17, %18 : vector<2x128xf32>
    %c0_17 = arith.constant 0 : index
    %c0_18 = arith.constant 0 : index
    %20 = vector.load %arg8[%c0_17, %c0_18] : memref<2x128xf32, #tpu.memory_space<vmem>>, vector<2x128xf32>
    tpu.vector_store %arg8[%c0_17, %c0_18], %19 {strides = array<i32>} : memref<2x128xf32, #tpu.memory_space<vmem>>, vector<2x128xf32>,
    return
  }
  func.func @transform_0(%arg0: i32) -> (i32, i32) {
    %c0_i32 = arith.constant 0 : i32
    %c0_i32_0 = arith.constant 0 : i32
    return %c0_i32, %arg0 : i32, i32
  }
  func.func @transform_1(%arg0: i32) -> (i32, i32) {
    %c0_i32 = arith.constant 0 : i32
    %c0_i32_0 = arith.constant 0 : i32
    %c0_i32_1 = arith.constant 0 : i32
    return %c0_i32, %c0_i32_0 : i32, i32
  }
  func.func @transform_2(%arg0: i32) -> (i32, i32) {
    %c0_i32 = arith.constant 0 : i32
    %c0_i32_0 = arith.constant 0 : i32
    %c0_i32_1 = arith.constant 0 : i32
    return %c0_i32, %c0_i32_0 : i32, i32
  }
  func.func @transform_3(%arg0: i32) -> (i32, i32) {
    %c0_i32 = arith.constant 0 : i32
    %c0_i32_0 = arith.constant 0 : i32
    %c0_i32_1 = arith.constant 0 : i32
    return %c0_i32, %c0_i32_0 : i32, i32
  }
  func.func @transform_4(%arg0: i32) -> (i32, i32) {
    %c0_i32 = arith.constant 0 : i32
    %c0_i32_0 = arith.constant 0 : i32
    %c0_i32_1 = arith.constant 0 : i32
    return %c0_i32, %c0_i32_0 : i32, i32
  }
  func.func @transform_5(%arg0: i32) -> (i32, i32) {
    %c0_i32 = arith.constant 0 : i32
    %c0_i32_0 = arith.constant 0 : i32
    %c0_i32_1 = arith.constant 0 : i32
    return %c0_i32, %c0_i32_0 : i32, i32
  }
  func.func @transform_6(%arg0: i32) -> (i32, i32) {
    %c0_i32 = arith.constant 0 : i32
    %c0_i32_0 = arith.constant 0 : i32
    %c0_i32_1 = arith.constant 0 : i32
    return %c0_i32, %c0_i32_0 : i32, i32
  }
  func.func @transform_7(%arg0: i32) -> (i32, i32) {
    %c0_i32 = arith.constant 0 : i32
    %c0_i32_0 = arith.constant 0 : i32
    return %c0_i32, %arg0 : i32, i32
  }
}

</mosaic_0001>

<llo_original>
// kernel: tpu_custom_call.1
$region0: #{tpu_custom_call.1}
  #allocation0 [shape = 'u32[]', space=smem, size = 0x4, offset = 0x4, fixed_abs, tag = 'smem constant byte address 0x4 - core index']
  #allocation1 [shape = 'u32[144,128]{1,0:T(1,128)}', space=vmem, size = 0x12000, scoped, tag = 'internal scratch']
  %s0 = inlined_call_operand.vmem [shape: f32[2,128], index: 0, kind: input, shape index: {}]
  %s1 = inlined_call_operand.vmem [shape: f32[16,2], index: 1, kind: input, shape index: {}]
  %s2 = inlined_call_operand.vmem [shape: f32[16,1], index: 2, kind: input, shape index: {}]
  %s3 = inlined_call_operand.vmem [shape: f32[32,16], index: 3, kind: input, shape index: {}]
  %s4 = inlined_call_operand.vmem [shape: f32[32,1], index: 4, kind: input, shape index: {}]
  %s5 = inlined_call_operand.vmem [shape: f32[2,32], index: 5, kind: input, shape index: {}]
  %s6 = inlined_call_operand.vmem [shape: f32[2,1], index: 6, kind: input, shape index: {}]
  %s7 = inlined_call_operand.hbm [shape: f32[2,128], index: 7, kind: output, shape index: {}]
  %s8 = sld [smem:[#allocation0]]
  $region38: #{tpu_custom_call.1} parent=0
    _
  %s10 = ssub.s32 1, %s8
  %s11 = scalar_select 0, %s10, %s8
  $region1: #{tpu_custom_call.1} parent=0
    #allocation2 [shape = 'u8[1024]{0}', space=vmem, size = 0x400, scoped, tag = 'output window, operand 0, single buffered']
    #allocation3 [shape = 's32[1]{0}', space=sflag, size = 0x4, scoped, tag = 'scoped memory for tpu_custom_call.1']
    %12 = vsyncpa [#allocation3], 0
    // Predicated region
    $region2: #{tpu_custom_call.1} parent=1 // pred_check
      _
    $region3: #{tpu_custom_call.1} parent=1 // pred_check_branch
      %14 = sbr.rel (0) target = $region5
    $region4: #{tpu_custom_call.1} parent=1 // pred_region
      _
    $region5: #{tpu_custom_call.1} parent=1 // pred_fallthru
      _
    // Predicated region
    $region6: #{tpu_custom_call.1} parent=1 // pred_check
      _
    $region7: #{tpu_custom_call.1} parent=1 // pred_check_branch
      %16 = sbr.rel (0) target = $region9
    $region8: #{tpu_custom_call.1} parent=1 // pred_region
      _
    $region9: #{tpu_custom_call.1} parent=1 // pred_fallthru
      _
    // Predicated region
    $region10: #{tpu_custom_call.1} parent=1 // pred_check
      _
    $region11: #{tpu_custom_call.1} parent=1 // pred_check_branch
      %18 = sbr.rel (0) target = $region13
    $region12: #{tpu_custom_call.1} parent=1 // pred_region
      _
    $region13: #{tpu_custom_call.1} parent=1 // pred_fallthru
      _
    // Predicated region
    $region14: #{tpu_custom_call.1} parent=1 // pred_check
      _
    $region15: #{tpu_custom_call.1} parent=1 // pred_check_branch
      %20 = sbr.rel (0) target = $region17
    $region16: #{tpu_custom_call.1} parent=1 // pred_region
      _
    $region17: #{tpu_custom_call.1} parent=1 // pred_fallthru
      _
    // Predicated region
    $region18: #{tpu_custom_call.1} parent=1 // pred_check
      _
    $region19: #{tpu_custom_call.1} parent=1 // pred_check_branch
      %22 = sbr.rel (0) target = $region21
    $region20: #{tpu_custom_call.1} parent=1 // pred_region
      _
    $region21: #{tpu_custom_call.1} parent=1 // pred_fallthru
      _
    // Predicated region
    $region22: #{tpu_custom_call.1} parent=1 // pred_check
      _
    $region23: #{tpu_custom_call.1} parent=1 // pred_check_branch
      %24 = sbr.rel (0) target = $region25
    $region24: #{tpu_custom_call.1} parent=1 // pred_region
      _
    $region25: #{tpu_custom_call.1} parent=1 // pred_fallthru
      _
    // Predicated region
    $region26: #{tpu_custom_call.1} parent=1 // pred_check
      _
    $region27: #{tpu_custom_call.1} parent=1 // pred_check_branch
      %26 = sbr.rel (0) target = $region29
    $region28: #{tpu_custom_call.1} parent=1 // pred_region
      _
    $region29: #{tpu_custom_call.1} parent=1 // pred_fallthru
      _
    %v27 = vld [vmem:[%s1] sm:$0xff]
    %v28 = vld [vmem:[%s1 + $0x8] sm:$0xff]
    %v29 = vld [vmem:[%s2] sm:$0xff]
    %v30 = vld [vmem:[%s2 + $0x8] sm:$0xff]
    %v31 = vld [vmem:[%s3] sm:$0xff]
    %v32 = vld [vmem:[%s3 + $0x8] sm:$0xff]
    %v33 = vld [vmem:[%s3 + $0x10] sm:$0xff]
    %v34 = vld [vmem:[%s3 + $0x18] sm:$0xff]
    %v35 = vld [vmem:[%s4] sm:$0xff]
    %v36 = vld [vmem:[%s4 + $0x8] sm:$0xff]
    %v37 = vld [vmem:[%s4 + $0x10] sm:$0xff]
    %v38 = vld [vmem:[%s4 + $0x18] sm:$0xff]
    %v39 = vld [vmem:[%s5] sm:$0x3]
    %v40 = vld [vmem:[%s6] sm:$0x3]
    %v41 = vld [vmem:[%s0] sm:$0x3]
    %43 = vset.pattern.permute.xlu0 0
    %44 = vperm.xlu0 %43, %v29
    %v45 = vpop.permute.xlu0 %44
    %48 = vset.pattern.permute.xlu0 0
    %49 = vperm.xlu0 %48, %v30
    %v50 = vpop.permute.xlu0 %49
    %vm52 = vcmask 15360
    %v54 = vsel %vm52, %v27, 0
    %v57 = vsel %vm52, %v28, 0
    %vm59 = vcmask 1041408
    %v61 = vsel %vm59, %v41, 0
    %63 = vmatprep.subr.mxu0 0.0
    %64 = vmatpush1.msra.mxu0 %v61
    %65 = vmatprep.subr.mxu0 0.0
    %66 = vmatpush1.msra.mxu0 0.0
    %67 = vmatprep.subr.mxu0 0.0
    %68 = vmatpush1.msra.mxu0 0.0
    %69 = vmatprep.subr.mxu0 0.0
    %70 = vmatpush1.msra.mxu0 0.0
    %71 = vmatprep.subr.mxu0 0.0
    %72 = vmatpush1.msra.mxu0 0.0
    %73 = vmatprep.subr.mxu0 0.0
    %74 = vmatpush1.msra.mxu0 0.0
    %75 = vmatprep.subr.mxu0 0.0
    %76 = vmatpush1.msra.mxu0 0.0
    %77 = vmatprep.subr.mxu0 0.0
    %78 = vmatpush1.msra.mxu0 0.0
    %79 = vmatprep.subr.mxu0 0.0
    %80 = vmatpush1.msra.mxu0 0.0
    %81 = vmatprep.subr.mxu0 0.0
    %82 = vmatpush1.msra.mxu0 0.0
    %83 = vmatprep.subr.mxu0 0.0
    %84 = vmatpush1.msra.mxu0 0.0
    %85 = vmatprep.subr.mxu0 0.0
    %86 = vmatpush1.msra.mxu0 0.0
    %87 = vmatprep.subr.mxu0 0.0
    %88 = vmatpush1.msra.mxu0 0.0
    %89 = vmatprep.subr.mxu0 0.0
    %90 = vmatpush1.msra.mxu0 0.0
    %91 = vmatprep.subr.mxu0 0.0
    %92 = vmatpush1.msra.mxu0 0.0
    %93 = vmatprep.subr.mxu0 0.0
    %94 = vmatpush1.msra.mxu0 0.0
    %95 = vmatprep.subr.mxu0 0.0
    %96 = vmatpush1.msra.mxu0 0.0
    %97 = vmatprep.subr.mxu0 0.0
    %98 = vmatpush1.msra.mxu0 0.0
    %99 = vmatprep.subr.mxu0 0.0
    %100 = vmatpush1.msra.mxu0 0.0
    %101 = vmatprep.subr.mxu0 0.0
    %102 = vmatpush1.msra.mxu0 0.0
    %103 = vmatprep.subr.mxu0 0.0
    %104 = vmatpush1.msra.mxu0 0.0
    %105 = vmatprep.subr.mxu0 0.0
    %106 = vmatpush1.msra.mxu0 0.0
    %107 = vmatprep.subr.mxu0 0.0
    %108 = vmatpush1.msra.mxu0 0.0
    %109 = vmatprep.subr.mxu0 0.0
    %110 = vmatpush1.msra.mxu0 0.0
    %111 = vmatprep.subr.mxu0 0.0
    %112 = vmatpush1.msra.mxu0 0.0
    %113 = vmatprep.subr.mxu0 0.0
    %114 = vmatpush1.msra.mxu0 0.0
    %115 = vmatprep.subr.mxu0 0.0
    %116 = vmatpush1.msra.mxu0 0.0
    %117 = vmatprep.subr.mxu0 0.0
    %118 = vmatpush1.msra.mxu0 0.0
    %119 = vmatprep.subr.mxu0 0.0
    %120 = vmatpush1.msra.mxu0 0.0
    %121 = vmatprep.subr.mxu0 0.0
    %122 = vmatpush1.msra.mxu0 0.0
    %123 = vmatprep.subr.mxu0 0.0
    %124 = vmatpush1.msra.mxu0 0.0
    %125 = vmatprep.subr.mxu0 0.0
    %126 = vmatpush1.msra.mxu0 0.0
    %127 = vmatprep.mubr.f32.mxu0 0.0
    %128 = vmatmul.mubr.f32.gmra.mrb[0].mxu0 %v54
    %v129 = vpop.f32.mrb[0].mxu0
    %v130 = vadd.f32 %v45, %v129
    %v131 = vpop.f32.mrb[0].mxu0
    %132 = vmatprep.mubr.f32.mxu0 0.0
    %133 = vmatmul.mubr.f32.gmra.mrb[0].mxu0 %v57
    %v134 = vpop.f32.mrb[0].mxu0
    %v135 = vadd.f32 %v50, %v134
    %v136 = vpop.f32.mrb[0].mxu0
    %137 = vdwg.mxu0
    %v138 = vmax.f32 %v130, 0.0
    %v139 = vmax.f32 %v135, 0.0
    %141 = vset.pattern.permute.xlu0 0
    %142 = vperm.xlu0 %141, %v35
    %v143 = vpop.permute.xlu0 %142
    %146 = vset.pattern.permute.xlu0 0
    %147 = vperm.xlu0 %146, %v36
    %v148 = vpop.permute.xlu0 %147
    %151 = vset.pattern.permute.xlu0 0
    %152 = vperm.xlu0 %151, %v37
    %v153 = vpop.permute.xlu0 %152
    %156 = vset.pattern.permute.xlu0 0
    %157 = vperm.xlu0 %156, %v38
    %v158 = vpop.permute.xlu0 %157
    %vm160 = vcmask 130048
    %v162 = vsel %vm160, %v31, 0
    %v165 = vsel %vm160, %v32, 0
    %v168 = vsel %vm160, %v33, 0
    %v171 = vsel %vm160, %v34, 0
    %173 = vmatprep.subr.mxu0 0.0
    %174 = vmatpush1.msra.mxu0 %v138
    %175 = vmatprep.subr.mxu0 0.0
    %176 = vmatpush1.msra.mxu0 %v139
    %177 = vmatprep.subr.mxu0 0.0
    %178 = vmatpush1.msra.mxu0 0.0
    %179 = vmatprep.subr.mxu0 0.0
    %180 = vmatpush1.msra.mxu0 0.0
    %181 = vmatprep.subr.mxu0 0.0
    %182 = vmatpush1.msra.mxu0 0.0
    %183 = vmatprep.subr.mxu0 0.0
    %184 = vmatpush1.msra.mxu0 0.0
    %185 = vmatprep.subr.mxu0 0.0
    %186 = vmatpush1.msra.mxu0 0.0
    %187 = vmatprep.subr.mxu0 0.0
    %188 = vmatpush1.msra.mxu0 0.0
    %189 = vmatprep.subr.mxu0 0.0
    %190 = vmatpush1.msra.mxu0 0.0
    %191 = vmatprep.subr.mxu0 0.0
    %192 = vmatpush1.msra.mxu0 0.0
    %193 = vmatprep.subr.mxu0 0.0
    %194 = vmatpush1.msra.mxu0 0.0
    %195 = vmatprep.subr.mxu0 0.0
    %196 = vmatpush1.msra.mxu0 0.0
    %197 = vmatprep.subr.mxu0 0.0
    %198 = vmatpush1.msra.mxu0 0.0
    %199 = vmatprep.subr.mxu0 0.0
    %200 = vmatpush1.msra.mxu0 0.0
    %201 = vmatprep.subr.mxu0 0.0
    %202 = vmatpush1.msra.mxu0 0.0
    %203 = vmatprep.subr.mxu0 0.0
    %204 = vmatpush1.msra.mxu0 0.0
    %205 = vmatprep.subr.mxu0 0.0
    %206 = vmatpush1.msra.mxu0 0.0
    %207 = vmatprep.subr.mxu0 0.0
    %208 = vmatpush1.msra.mxu0 0.0
    %209 = vmatprep.subr.mxu0 0.0
    %210 = vmatpush1.msra.mxu0 0.0
    %211 = vmatprep.subr.mxu0 0.0
    %212 = vmatpush1.msra.mxu0 0.0
    %213 = vmatprep.subr.mxu0 0.0
    %214 = vmatpush1.msra.mxu0 0.0
    %215 = vmatprep.subr.mxu0 0.0
    %216 = vmatpush1.msra.mxu0 0.0
    %217 = vmatprep.subr.mxu0 0.0
    %218 = vmatpush1.msra.mxu0 0.0
    %219 = vmatprep.subr.mxu0 0.0
    %220 = vmatpush1.msra.mxu0 0.0
    %221 = vmatprep.subr.mxu0 0.0
    %222 = vmatpush1.msra.mxu0 0.0
    %223 = vmatprep.subr.mxu0 0.0
    %224 = vmatpush1.msra.mxu0 0.0
    %225 = vmatprep.subr.mxu0 0.0
    %226 = vmatpush1.msra.mxu0 0.0
    %227 = vmatprep.subr.mxu0 0.0
    %228 = vmatpush1.msra.mxu0 0.0
    %229 = vmatprep.subr.mxu0 0.0
    %230 = vmatpush1.msra.mxu0 0.0
    %231 = vmatprep.subr.mxu0 0.0
    %232 = vmatpush1.msra.mxu0 0.0
    %233 = vmatprep.subr.mxu0 0.0
    %234 = vmatpush1.msra.mxu0 0.0
    %235 = vmatprep.subr.mxu0 0.0
    %236 = vmatpush1.msra.mxu0 0.0
    %237 = vmatprep.mubr.f32.mxu0 0.0
    %238 = vmatmul.mubr.f32.gmra.mrb[0].mxu0 %v162
    %v239 = vpop.f32.mrb[0].mxu0
    %v240 = vadd.f32 %v143, %v239
    %v241 = vpop.f32.mrb[0].mxu0
    %242 = vmatprep.mubr.f32.mxu0 0.0
    %243 = vmatmul.mubr.f32.gmra.mrb[0].mxu0 %v165
    %v244 = vpop.f32.mrb[0].mxu0
    %v245 = vadd.f32 %v148, %v244
    %v246 = vpop.f32.mrb[0].mxu0
    %247 = vmatprep.mubr.f32.mxu0 0.0
    %248 = vmatmul.mubr.f32.gmra.mrb[0].mxu0 %v168
    %v249 = vpop.f32.mrb[0].mxu0
    %v250 = vadd.f32 %v153, %v249
    %v251 = vpop.f32.mrb[0].mxu0
    %252 = vmatprep.mubr.f32.mxu0 0.0
    %253 = vmatmul.mubr.f32.gmra.mrb[0].mxu0 %v171
    %v254 = vpop.f32.mrb[0].mxu0
    %v255 = vadd.f32 %v158, %v254
    %v256 = vpop.f32.mrb[0].mxu0
    %257 = vdwg.mxu0
    %v258 = vmax.f32 %v240, 0.0
    %v259 = vmax.f32 %v245, 0.0
    %v260 = vmax.f32 %v250, 0.0
    %v261 = vmax.f32 %v255, 0.0
    %263 = vset.pattern.permute.xlu0 0
    %264 = vperm.xlu0 %263, %v40
    %v265 = vpop.permute.xlu0 %264
    %vm267 = vcmask 261120
    %v269 = vsel %vm267, %v39, 0
    %271 = vmatprep.subr.mxu0 0.0
    %272 = vmatpush1.msra.mxu0 %v258
    %273 = vmatprep.subr.mxu0 0.0
    %274 = vmatpush1.msra.mxu0 %v259
    %275 = vmatprep.subr.mxu0 0.0
    %276 = vmatpush1.msra.mxu0 %v260
    %277 = vmatprep.subr.mxu0 0.0
    %278 = vmatpush1.msra.mxu0 %v261
    %279 = vmatprep.subr.mxu0 0.0
    %280 = vmatpush1.msra.mxu0 0.0
    %281 = vmatprep.subr.mxu0 0.0
    %282 = vmatpush1.msra.mxu0 0.0
    %283 = vmatprep.subr.mxu0 0.0
    %284 = vmatpush1.msra.mxu0 0.0
    %285 = vmatprep.subr.mxu0 0.0
    %286 = vmatpush1.msra.mxu0 0.0
    %287 = vmatprep.subr.mxu0 0.0
    %288 = vmatpush1.msra.mxu0 0.0
    %289 = vmatprep.subr.mxu0 0.0
    %290 = vmatpush1.msra.mxu0 0.0
    %291 = vmatprep.subr.mxu0 0.0
    %292 = vmatpush1.msra.mxu0 0.0
    %293 = vmatprep.subr.mxu0 0.0
    %294 = vmatpush1.msra.mxu0 0.0
    %295 = vmatprep.subr.mxu0 0.0
    %296 = vmatpush1.msra.mxu0 0.0
    %297 = vmatprep.subr.mxu0 0.0
    %298 = vmatpush1.msra.mxu0 0.0
    %299 = vmatprep.subr.mxu0 0.0
    %300 = vmatpush1.msra.mxu0 0.0
    %301 = vmatprep.subr.mxu0 0.0
    %302 = vmatpush1.msra.mxu0 0.0
    %303 = vmatprep.subr.mxu0 0.0
    %304 = vmatpush1.msra.mxu0 0.0
    %305 = vmatprep.subr.mxu0 0.0
    %306 = vmatpush1.msra.mxu0 0.0
    %307 = vmatprep.subr.mxu0 0.0
    %308 = vmatpush1.msra.mxu0 0.0
    %309 = vmatprep.subr.mxu0 0.0
    %310 = vmatpush1.msra.mxu0 0.0
    %311 = vmatprep.subr.mxu0 0.0
    %312 = vmatpush1.msra.mxu0 0.0
    %313 = vmatprep.subr.mxu0 0.0
    %314 = vmatpush1.msra.mxu0 0.0
    %315 = vmatprep.subr.mxu0 0.0
    %316 = vmatpush1.msra.mxu0 0.0
    %317 = vmatprep.subr.mxu0 0.0
    %318 = vmatpush1.msra.mxu0 0.0
    %319 = vmatprep.subr.mxu0 0.0
    %320 = vmatpush1.msra.mxu0 0.0
    %321 = vmatprep.subr.mxu0 0.0
    %322 = vmatpush1.msra.mxu0 0.0
    %323 = vmatprep.subr.mxu0 0.0
    %324 = vmatpush1.msra.mxu0 0.0
    %325 = vmatprep.subr.mxu0 0.0
    %326 = vmatpush1.msra.mxu0 0.0
    %327 = vmatprep.subr.mxu0 0.0
    %328 = vmatpush1.msra.mxu0 0.0
    %329 = vmatprep.subr.mxu0 0.0
    %330 = vmatpush1.msra.mxu0 0.0
    %331 = vmatprep.subr.mxu0 0.0
    %332 = vmatpush1.msra.mxu0 0.0
    %333 = vmatprep.subr.mxu0 0.0
    %334 = vmatpush1.msra.mxu0 0.0
    %335 = vmatprep.mubr.f32.mxu0 0.0
    %336 = vmatmul.mubr.f32.gmra.mrb[0].mxu0 %v269
    %v337 = vpop.f32.mrb[0].mxu0
    %v338 = vadd.f32 %v265, %v337
    %v339 = vpop.f32.mrb[0].mxu0
    %340 = vdwg.mxu0
    %341 = vst [vmem:[#allocation2] sm:$0x3] %v338
    // Predicated region
    $region30: #{tpu_custom_call.1} parent=1 // pred_check
      _
    $region31: #{tpu_custom_call.1} parent=1 // pred_check_branch
      %343 = sbr.rel (0) target = $region33
    $region32: #{tpu_custom_call.1} parent=1 // pred_region
      %s345 = ssub.s32 32, 32
      %346 = vsyncadd [#allocation3], %s345
      %s348 = sshll.u32 [#allocation2], 4
      %s349 = int_to_ptr.vmem [resolvable:$true] %s348
      %351 = dma.vmem_to_hbm [thread:$0]  %s349, 32, %s7, [#allocation3]
    $region33: #{tpu_custom_call.1} parent=1 // pred_fallthru
      _
    // Predicated region
    $region34: #{tpu_custom_call.1} parent=1 // pred_check
      _
    $region35: #{tpu_custom_call.1} parent=1 // pred_check_branch
      %353 = sbr.rel (0) target = $region37
    $region36: #{tpu_custom_call.1} parent=1 // pred_region
      %354 = dma.done [#allocation3], 32
    $region37: #{tpu_custom_call.1} parent=1 // pred_fallthru
      _
    %355 = vsyncpa [#allocation3], 1

</llo_original>
